<compile_context>
chip_gen: v5e
topology: v5e:2x2
jax: 0.10.0
libtpu: 0.0.40
codegen_flags: <defaults>
</compile_context>

<pallas_src>
import functools

import jax
import jax.numpy as jnp
from jax.experimental import pallas as pl
from jax.experimental.pallas import tpu as pltpu


_RESIDENT_ZJS_BYTES = 8 * 2**20   # keep whole bf16 zjs_n column-resident when <= 8 MiB
_VMEM_BUDGET = 40 * 2**20         # v7x-safe working-set target
_FIXED_MAX_LIMIT = 80.0           # fixed-max LSE safe while 2/temperature < ~80


def _ntxent_kernel(zis_ref, zjsn_col_ref, zjsn_row_ref, out_ref,
                   zisn_ref, m_ref, l_ref, *, inv_temp, use_fixed_max):
    j = pl.program_id(1)
    num_j = pl.num_programs(1)
    inv_t = jnp.float32(inv_temp)
    eps_sq = jnp.float32(1e-24)   # == clamping ||x|| at 1e-12

    @pl.when(j == 0)
    def _init():
        # Normalize the query (row) tile ONCE per row tile; fold in 1/temperature.
        zis = zis_ref[...].astype(jnp.float32)                       # (TM, D)
        inv = jax.lax.rsqrt(
            jnp.maximum(jnp.sum(zis * zis, axis=1, keepdims=True), eps_sq))
        zisn_ref[...] = (zis * (inv * inv_t)).astype(jnp.bfloat16)   # (TM, D) bf16
        l_ref[...] = jnp.zeros_like(l_ref)
        if not use_fixed_max:
            m_ref[...] = jnp.full_like(m_ref, -jnp.inf)

    # sim tile in "NT" form (contract last dims, no transpose); bf16 operands,
    # f32 accumulation on the MXU.
    s = jax.lax.dot_general(
        zisn_ref[...], zjsn_col_ref[...],
        dimension_numbers=(((1,), (1,)), ((), ())),
        preferred_element_type=jnp.float32)                          # (TM, TN)

    if use_fixed_max:
        # |cos| <= 1  =>  sim <= 1/temperature: fixed max, no running-max
        # dependency, no rescale, one fewer XLU reduce per tile.
        l_ref[...] += jnp.sum(jnp.exp(s - inv_t), axis=1, keepdims=True)
    else:
        m_prev = m_ref[...]
        m_new = jnp.maximum(m_prev, jnp.max(s, axis=1, keepdims=True))
        alpha = jnp.exp(m_prev - m_new)
        l_ref[...] = alpha * l_ref[...] + jnp.sum(jnp.exp(s - m_new), axis=1,
                                                  keepdims=True)
        m_ref[...] = m_new

    @pl.when(j == num_j - 1)
    def _finalize():
        # Positive logit = <zis_n[i], zjs_n[i]> (1/temperature already folded in).
        # zjs row tile arrives pre-normalized (bf16) from the wrapper.
        zis_n = zisn_ref[...].astype(jnp.float32)
        zr_n = zjsn_row_ref[...].astype(jnp.float32)
        pos = jnp.sum(zis_n * zr_n, axis=1, keepdims=True)           # (TM, 1)
        if use_fixed_max:
            lse = inv_t + jnp.log(l_ref[...])
        else:
            lse = m_ref[...] + jnp.log(l_ref[...])
        out_ref[...] = lse - pos


def _pick_tile(b, cap):
    """Largest t <= cap with b % t == 0 and t a multiple of 8 (or t == b)."""
    if b <= cap:
        return b
    for t in range(cap - cap % 8, 7, -8):
        if b % t == 0:
            return t
    return b


def _vmem_bytes(tm, tn, d):
    dbuf_inputs = 2 * (tm * d * 4 + tn * d * 2 + tm * d * 2)  # zis f32, zjs_n col/row bf16
    scratch = tm * d * 2 + 2 * (tm * 4)                       # zis_n bf16 + m + l
    work = 3 * tm * tn * 4                                    # s tile + exp temp + slack
    return dbuf_inputs + scratch + work + 2 * tm * 4


def ntxent_loss(zis, zjs, temperature, *, tm=None, tn=None):
    """NT-Xent loss. zis, zjs: (B, D). Returns scalar f32 loss."""
    B, D = zis.shape
    assert zjs.shape == (B, D)
    temperature = float(temperature)
    inv_temp = 1.0 / temperature
    use_fixed_max = (2.0 * inv_temp) < _FIXED_MAX_LIMIT

    # Pre-normalize zjs once in the wrapper (single XLA pass over (B, D)) and
    # store it bf16: halves the dominant zjs HBM stream and removes all
    # per-tile column / positive-row normalizations from the kernel.
    zjs32 = zjs.astype(jnp.float32)
    zjs_n = (zjs32 * jax.lax.rsqrt(
        jnp.maximum(jnp.sum(zjs32 * zjs32, axis=1, keepdims=True),
                    jnp.float32(1e-24)))).astype(jnp.bfloat16)

    auto_tm = tm is None
    auto_tn = tn is None
    if auto_tm:
        tm = _pick_tile(B, 512)          # num_i >= 2 whenever B > 512 (v7x 2 TCs)
    if auto_tn:
        tn = B if (B * D * 2 <= _RESIDENT_ZJS_BYTES) else _pick_tile(B, 256)

    assert B % tm == 0 and (tm % 8 == 0 or tm == B), "bad tm"
    assert B % tn == 0 and (tn % 8 == 0 or tn == B), "bad tn"

    # Auto-shrink auto-chosen tiles to stay within a v7x-safe VMEM budget.
    for _ in range(8):
        if _vmem_bytes(tm, tn, D) <= _VMEM_BUDGET:
            break
        if auto_tm and tm > 8 and tm >= tn:
            nt = _pick_tile(B, max(8, tm // 2))
            if nt < tm:
                tm = nt
                continue
        if auto_tn and tn > 8:
            nt = _pick_tile(B, max(8, tn // 2))
            if nt < tn:
                tn = nt
                continue
        break

    num_i = B // tm
    num_j = B // tn

    est = _vmem_bytes(tm, tn, D)
    compiler_kwargs = dict(dimension_semantics=("parallel", "arbitrary"))
    if est > 28 * 2**20:
        compiler_kwargs["vmem_limit_bytes"] = int(min(est * 1.25, 60 * 2**20))

    kernel = functools.partial(_ntxent_kernel, inv_temp=inv_temp,
                               use_fixed_max=use_fixed_max)

    per_row = pl.pallas_call(
        kernel,
        out_shape=jax.ShapeDtypeStruct((B, 1), jnp.float32),
        grid_spec=pltpu.PrefetchScalarGridSpec(
            num_scalar_prefetch=0,
            grid=(num_i, num_j),
            in_specs=[
                # zis row tile: constant across j -> DMA'd once per row tile.
                pl.BlockSpec((tm, D), lambda i, j: (i, 0)),
                # Pre-normalized bf16 zjs column tile. If tn == B the index is
                # constant over the whole grid -> fetched once, fully resident.
                pl.BlockSpec((tn, D), lambda i, j: (j, 0)),
                # Pre-normalized bf16 zjs row tile (positives), constant across j.
                pl.BlockSpec((tm, D), lambda i, j: (i, 0)),
            ],
            out_specs=pl.BlockSpec((tm, 1), lambda i, j: (i, 0)),
            scratch_shapes=[
                pltpu.VMEM((tm, D), jnp.bfloat16),   # zis_n * (1/T), hoisted to j==0
                pltpu.VMEM((tm, 1), jnp.float32),    # running max (online path only)
                pltpu.VMEM((tm, 1), jnp.float32),    # running sum of exp
            ],
        ),
        compiler_params=pltpu.CompilerParams(**compiler_kwargs),
    )(zis, zjs_n, zjs_n)

    # Mean hoisted out of the kernel: one tiny XLA reduce + scalar divide.
    return jnp.sum(per_row) / jnp.float32(B)


def _reference(zis, zjs, temperature):
    zis = zis.astype(jnp.float32)
    zjs = zjs.astype(jnp.float32)
    zis_n = zis / jnp.maximum(jnp.linalg.norm(zis, axis=1, keepdims=True), 1e-12)
    zjs_n = zjs / jnp.maximum(jnp.linalg.norm(zjs, axis=1, keepdims=True), 1e-12)
    sim = zis_n @ zjs_n.T / temperature
    pos = jnp.diagonal(sim)
    lse = jax.scipy.special.logsumexp(sim, axis=1)
    return jnp.mean(lse - pos)


if __name__ == "__main__":
    key = jax.random.PRNGKey(0)
    k1, k2, k3, k4, k5, k6 = jax.random.split(key, 6)

    # Case 1: small shapes matching the module's (batch, dim) convention.
    # Single tile, resident zjs, fixed-max path.
    B, D = 8, 32
    temperature = 0.5
    zis = jax.random.normal(k1, (B, D), dtype=jnp.float32)
    zjs = jax.random.normal(k2, (B, D), dtype=jnp.float32)
    loss = ntxent_loss(zis, zjs, temperature)
    jax.block_until_ready(loss)
    ref = _reference(zis, zjs, temperature)
    assert jnp.allclose(loss, ref, atol=5e-2, rtol=3e-2), (loss, ref)

    # Case 2: default tile selection -> fully VMEM-resident zjs_n (tn = B),
    # fixed-max path, bf16 MXU operands.
    B2, D2 = 256, 128
    temperature2 = 0.1
    zis2 = jax.random.normal(k3, (B2, D2), dtype=jnp.float32)
    zjs2 = jax.random.normal(k4, (B2, D2), dtype=jnp.float32)
    loss2 = ntxent_loss(zis2, zjs2, temperature2)
    jax.block_until_ready(loss2)
    ref2 = _reference(zis2, zjs2, temperature2)
    assert jnp.allclose(loss2, ref2, atol=5e-2, rtol=3e-2), (loss2, ref2)

    # Case 3: forced 2x2 grid exercising the multi-column-tile online-logsumexp
    # fallback (temperature small enough that the fixed-max path is disabled).
    temperature3 = 0.02
    zis3 = jax.random.normal(k5, (B2, D2), dtype=jnp.float32)
    zjs3 = jax.random.normal(k6, (B2, D2), dtype=jnp.float32)
    loss3 = ntxent_loss(zis3, zjs3, temperature3, tm=128, tn=128)
    jax.block_until_ready(loss3)
    ref3 = _reference(zis3, zjs3, temperature3)
    assert jnp.allclose(loss3, ref3, atol=5e-2, rtol=3e-2), (loss3, ref3)

    print("KERNEL_OK")
</pallas_src>

<mosaic_0001>
module attributes {stable_mosaic.version = 11 : i64} {
  func.func @_ntxent_kernel(%arg0: i32, %arg1: i32, %arg2: memref<8x32xf32, #tpu.memory_space<vmem>>, %arg3: memref<8x32xbf16, #tpu.memory_space<vmem>>, %arg4: memref<8x32xbf16, #tpu.memory_space<vmem>>, %arg5: memref<8x1xf32, #tpu.memory_space<vmem>>, %arg6: memref<8x32xbf16, #tpu.memory_space<vmem>>, %arg7: memref<8x1xf32, #tpu.memory_space<vmem>>, %arg8: memref<8x1xf32, #tpu.memory_space<vmem>>) attributes {dimension_semantics = [#tpu.dimension_semantics<parallel>, #tpu.dimension_semantics<arbitrary>], iteration_bounds = array<i64: 1, 1>, scalar_prefetch = 0 : i64, scratch_operands = 3 : i64, tpu.core_type = #tpu.core_type<tc>, window_params = [{transform_indices = @transform_0, window_bounds = array<i64: 8, 32>}, {transform_indices = @transform_1, window_bounds = array<i64: 8, 32>}, {transform_indices = @transform_2, window_bounds = array<i64: 8, 32>}, {transform_indices = @transform_3, window_bounds = array<i64: 8, 1>}]} {
    %c0_i32 = arith.constant 0 : i32
    %0 = arith.cmpi eq, %arg1, %c0_i32 : i32
    %1 = arith.extui %0 : i1 to i32
    %cst = arith.constant 1.000000e-24 : f32
    %cst_0 = arith.constant 2.000000e+00 : f32
    %c0_i32_1 = arith.constant 0 : i32
    %2 = arith.cmpi ne, %1, %c0_i32_1 : i32
    scf.if %2 {
      %c0_15 = arith.constant 0 : index
      %c0_16 = arith.constant 0 : index
      %17 = vector.load %arg2[%c0_15, %c0_16] : memref<8x32xf32, #tpu.memory_space<vmem>>, vector<8x32xf32>
      %18 = arith.mulf %17, %17 : vector<8x32xf32>
      %cst_17 = arith.constant dense<0.000000e+00> : vector<8xf32>
      %19 = vector.multi_reduction <add>, %18, %cst_17 [1] : vector<8x32xf32> to vector<8xf32>
      %20 = vector.shape_cast %19 : vector<8xf32> to vector<8x1xf32>
      %21 = vector.broadcast %cst : f32 to vector<8x1xf32>
      %22 = arith.maximumf %20, %21 : vector<8x1xf32>
      %23 = math.rsqrt %22 : vector<8x1xf32>
      %24 = vector.broadcast %cst_0 : f32 to vector<8x1xf32>
      %25 = arith.mulf %23, %24 : vector<8x1xf32>
      %26 = vector.broadcast %25 : vector<8x1xf32> to vector<8x32xf32>
      %27 = arith.mulf %17, %26 : vector<8x32xf32>
      %28 = arith.truncf %27 : vector<8x32xf32> to vector<8x32xbf16>
      %c0_18 = arith.constant 0 : index
      %c0_19 = arith.constant 0 : index
      %29 = vector.load %arg6[%c0_18, %c0_19] : memref<8x32xbf16, #tpu.memory_space<vmem>>, vector<8x32xbf16>
      tpu.vector_store %arg6[%c0_18, %c0_19], %28 {strides = array<i32>} : memref<8x32xbf16, #tpu.memory_space<vmem>>, vector<8x32xbf16>,
      %cst_20 = arith.constant 0.000000e+00 : f32
      %30 = vector.broadcast %cst_20 : f32 to vector<8x1xf32>
      %c0_21 = arith.constant 0 : index
      %c0_22 = arith.constant 0 : index
      %31 = vector.load %arg8[%c0_21, %c0_22] : memref<8x1xf32, #tpu.memory_space<vmem>>, vector<8x1xf32>
      tpu.vector_store %arg8[%c0_21, %c0_22], %30 {strides = array<i32>} : memref<8x1xf32, #tpu.memory_space<vmem>>, vector<8x1xf32>,
    } else {
    }
    %c0 = arith.constant 0 : index
    %c0_2 = arith.constant 0 : index
    %3 = vector.load %arg6[%c0, %c0_2] : memref<8x32xbf16, #tpu.memory_space<vmem>>, vector<8x32xbf16>
    %c0_3 = arith.constant 0 : index
    %c0_4 = arith.constant 0 : index
    %4 = vector.load %arg3[%c0_3, %c0_4] : memref<8x32xbf16, #tpu.memory_space<vmem>>, vector<8x32xbf16>
    %cst_5 = arith.constant dense<0.000000e+00> : vector<8x8xf32>
    %5 = tpu.matmul %3, %4, %cst_5 {dimension_numbers = #tpu.dot_dimension_numbers<[1], [1], [0], [0], [0, 0, 1, 0], [], []>} : vector<8x32xbf16>, vector<8x32xbf16>, vector<8x8xf32> -> vector<8x8xf32>
    %c0_6 = arith.constant 0 : index
    %c0_7 = arith.constant 0 : index
    %6 = vector.load %arg8[%c0_6, %c0_7] : memref<8x1xf32, #tpu.memory_space<vmem>>, vector<8x1xf32>
    %cst_8 = arith.constant 2.000000e+00 : f32
    %7 = vector.broadcast %cst_8 : f32 to vector<8x8xf32>
    %8 = arith.subf %5, %7 : vector<8x8xf32>
    %9 = math.exp %8 : vector<8x8xf32>
    %cst_9 = arith.constant dense<0.000000e+00> : vector<8xf32>
    %10 = vector.multi_reduction <add>, %9, %cst_9 [1] : vector<8x8xf32> to vector<8xf32>
    %11 = vector.shape_cast %10 : vector<8xf32> to vector<8x1xf32>
    %12 = arith.addf %6, %11 : vector<8x1xf32>
    %c0_10 = arith.constant 0 : index
    %c0_11 = arith.constant 0 : index
    %13 = vector.load %arg8[%c0_10, %c0_11] : memref<8x1xf32, #tpu.memory_space<vmem>>, vector<8x1xf32>
    tpu.vector_store %arg8[%c0_10, %c0_11], %12 {strides = array<i32>} : memref<8x1xf32, #tpu.memory_space<vmem>>, vector<8x1xf32>,
    %c0_i32_12 = arith.constant 0 : i32
    %14 = arith.cmpi eq, %arg1, %c0_i32_12 : i32
    %15 = arith.extui %14 : i1 to i32
    %cst_13 = arith.constant 2.000000e+00 : f32
    %c0_i32_14 = arith.constant 0 : i32
    %16 = arith.cmpi ne, %15, %c0_i32_14 : i32
    scf.if %16 {
      %c0_15 = arith.constant 0 : index
      %c0_16 = arith.constant 0 : index
      %17 = vector.load %arg6[%c0_15, %c0_16] : memref<8x32xbf16, #tpu.memory_space<vmem>>, vector<8x32xbf16>
      %18 = arith.extf %17 : vector<8x32xbf16> to vector<8x32xf32>
      %c0_17 = arith.constant 0 : index
      %c0_18 = arith.constant 0 : index
      %19 = vector.load %arg4[%c0_17, %c0_18] : memref<8x32xbf16, #tpu.memory_space<vmem>>, vector<8x32xbf16>
      %20 = arith.extf %19 : vector<8x32xbf16> to vector<8x32xf32>
      %21 = arith.mulf %18, %20 : vector<8x32xf32>
      %cst_19 = arith.constant dense<0.000000e+00> : vector<8xf32>
      %22 = vector.multi_reduction <add>, %21, %cst_19 [1] : vector<8x32xf32> to vector<8xf32>
      %23 = vector.shape_cast %22 : vector<8xf32> to vector<8x1xf32>
      %c0_20 = arith.constant 0 : index
      %c0_21 = arith.constant 0 : index
      %24 = vector.load %arg8[%c0_20, %c0_21] : memref<8x1xf32, #tpu.memory_space<vmem>>, vector<8x1xf32>
      %25 = math.log %24 : vector<8x1xf32>
      %26 = vector.broadcast %cst_13 : f32 to vector<8x1xf32>
      %27 = arith.addf %26, %25 : vector<8x1xf32>
      %28 = arith.subf %27, %23 : vector<8x1xf32>
      %c0_22 = arith.constant 0 : index
      %c0_23 = arith.constant 0 : index
      %29 = vector.load %arg5[%c0_22, %c0_23] : memref<8x1xf32, #tpu.memory_space<vmem>>, vector<8x1xf32>
      tpu.vector_store %arg5[%c0_22, %c0_23], %28 {strides = array<i32>} : memref<8x1xf32, #tpu.memory_space<vmem>>, vector<8x1xf32>,
    } else {
    }
    return
  }
  func.func @transform_0(%arg0: i32, %arg1: i32) -> (i32, i32) {
    %c0_i32 = arith.constant 0 : i32
    %c0_i32_0 = arith.constant 0 : i32
    return %arg0, %c0_i32 : i32, i32
  }
  func.func @transform_1(%arg0: i32, %arg1: i32) -> (i32, i32) {
    %c0_i32 = arith.constant 0 : i32
    %c0_i32_0 = arith.constant 0 : i32
    return %arg1, %c0_i32 : i32, i32
  }
  func.func @transform_2(%arg0: i32, %arg1: i32) -> (i32, i32) {
    %c0_i32 = arith.constant 0 : i32
    %c0_i32_0 = arith.constant 0 : i32
    return %arg0, %c0_i32 : i32, i32
  }
  func.func @transform_3(%arg0: i32, %arg1: i32) -> (i32, i32) {
    %c0_i32 = arith.constant 0 : i32
    %c0_i32_0 = arith.constant 0 : i32
    return %arg0, %c0_i32 : i32, i32
  }
}

</mosaic_0001>

<llo_original>
// kernel: tpu_custom_call.1
$region0: #{tpu_custom_call.1}
  #allocation0 [shape = 'u32[]', space=smem, size = 0x4, offset = 0x4, fixed_abs, tag = 'smem constant byte address 0x4 - core index']
  #allocation1 [shape = 'u32[72,128]{1,0:T(1,128)}', space=vmem, size = 0x9000, scoped, tag = 'internal scratch']
  #allocation2 [shape = 'bf16[8,32]{1,0:T(8,128)(2,1)}', space=vmem, size = 0x800, scoped, tag = 'scratch operand']
  #allocation3 [shape = 'f32[8,1]{1,0:T(8,128)}', space=vmem, size = 0x1000, scoped, tag = 'scratch operand']
  #allocation4 [shape = 'f32[8,1]{1,0:T(8,128)}', space=vmem, size = 0x1000, scoped, tag = 'scratch operand']
  %s0 = inlined_call_operand.hbm [shape: f32[8,32], index: 0, kind: input, shape index: {}]
  %s1 = inlined_call_operand.hbm [shape: bf16[8,32], index: 1, kind: input, shape index: {}]
  %s2 = inlined_call_operand.hbm [shape: bf16[8,32], index: 2, kind: input, shape index: {}]
  %s3 = inlined_call_operand.vmem [shape: f32[8,1], index: 3, kind: output, shape index: {}]
  %s4 = sld [smem:[#allocation0]]
  $region42: #{tpu_custom_call.1} parent=0
    _
  %s6 = ssub.s32 1, %s4
  %s7 = scalar_select 0, %s6, %s4
  $region1: #{tpu_custom_call.1} parent=0
    #allocation5 [shape = 'u8[4096]{0}', space=vmem, size = 0x1000, scoped, tag = 'input window, operand 0, single buffered']
    #allocation6 [shape = 's32[1]{0}', space=sflag, size = 0x4, scoped, tag = 'scoped memory for tpu_custom_call.1']
    #allocation7 [shape = 'u8[2048]{0}', space=vmem, size = 0x800, scoped, tag = 'input window, operand 1, single buffered']
    #allocation8 [shape = 's32[1]{0}', space=sflag, size = 0x4, scoped, tag = 'scoped memory for tpu_custom_call.1']
    #allocation9 [shape = 'u8[2048]{0}', space=vmem, size = 0x800, scoped, tag = 'input window, operand 2, single buffered']
    %8 = vsyncpa [#allocation6], 0
    %9 = vsyncpa [#allocation8], 0
    // Predicated region
    $region2: #{tpu_custom_call.1} parent=1 // pred_check
      _
    $region3: #{tpu_custom_call.1} parent=1 // pred_check_branch
      %11 = sbr.rel (0) target = $region5
    $region4: #{tpu_custom_call.1} parent=1 // pred_region
      %13 = vsyncadd [#allocation6], 0
      %s15 = sshll.u32 %s0, 4
      %s16 = int_to_ptr.hbm [resolvable:$true] %s15
      %s17 = sshll.u32 [#allocation5], 4
      %s18 = int_to_ptr.vmem [resolvable:$true] %s17
      %20 = dma.hbm_to_vmem [thread:$0]  %s16, 128, %s18, [#allocation6]
    $region5: #{tpu_custom_call.1} parent=1 // pred_fallthru
      _
    // Predicated region
    $region6: #{tpu_custom_call.1} parent=1 // pred_check
      _
    $region7: #{tpu_custom_call.1} parent=1 // pred_check_branch
      %22 = sbr.rel (0) target = $region9
    $region8: #{tpu_custom_call.1} parent=1 // pred_region
      %24 = vsyncadd [#allocation8], 0
      %s26 = sshll.u32 %s1, 4
      %s27 = int_to_ptr.hbm [resolvable:$true] %s26
      %s28 = sshll.u32 [#allocation7], 4
      %s29 = int_to_ptr.vmem [resolvable:$true] %s28
      %31 = dma.hbm_to_vmem [thread:$0]  %s27, 64, %s29, [#allocation8]
    $region9: #{tpu_custom_call.1} parent=1 // pred_fallthru
      _
    // Predicated region
    $region10: #{tpu_custom_call.1} parent=1 // pred_check
      _
    $region11: #{tpu_custom_call.1} parent=1 // pred_check_branch
      %33 = sbr.rel (0) target = $region13
    $region12: #{tpu_custom_call.1} parent=1 // pred_region
      %35 = vsyncadd [#allocation8], 0
      %s37 = sshll.u32 %s2, 4
      %s38 = int_to_ptr.hbm [resolvable:$true] %s37
      %s39 = sshll.u32 [#allocation9], 4
      %s40 = int_to_ptr.vmem [resolvable:$true] %s39
      %42 = dma.hbm_to_vmem [thread:$0]  %s38, 64, %s40, [#allocation8]
    $region13: #{tpu_custom_call.1} parent=1 // pred_fallthru
      _
    // Predicated region
    $region14: #{tpu_custom_call.1} parent=1 // pred_check
      _
    $region15: #{tpu_custom_call.1} parent=1 // pred_check_branch
      %44 = sbr.rel (0) target = $region17
    $region16: #{tpu_custom_call.1} parent=1 // pred_region
      %46 = dma.done [#allocation6], 128
    $region17: #{tpu_custom_call.1} parent=1 // pred_fallthru
      _
    // Predicated region
    $region18: #{tpu_custom_call.1} parent=1 // pred_check
      _
    $region19: #{tpu_custom_call.1} parent=1 // pred_check_branch
      %48 = sbr.rel (0) target = $region21
    $region20: #{tpu_custom_call.1} parent=1 // pred_region
      %50 = dma.done [#allocation8], 64
    $region21: #{tpu_custom_call.1} parent=1 // pred_fallthru
      _
    // Predicated region
    $region22: #{tpu_custom_call.1} parent=1 // pred_check
      _
    $region23: #{tpu_custom_call.1} parent=1 // pred_check_branch
      %52 = sbr.rel (0) target = $region25
    $region24: #{tpu_custom_call.1} parent=1 // pred_region
      %54 = dma.done [#allocation8], 64
    $region25: #{tpu_custom_call.1} parent=1 // pred_fallthru
      _
    %p56 = scmp.eq.s32.totalorder 0, 0
    // Predicated region
    $region26: #{tpu_custom_call.1} parent=1 // pred_check
      %p57 = pneg %p56
    $region27: #{tpu_custom_call.1} parent=1 // pred_check_branch
      %59 = sbr.rel (%p57) target = $region29
    $region28: #{tpu_custom_call.1} parent=1 // pred_region
      %v60 = vld [vmem:[#allocation5] sm:$0xff]
      %v61 = vmul.f32 %v60, %v60
      %vm62 = vcmask 261120
      %v63 = vsel %vm62, %v61, 0.0
      %64 = vadd.xlane.f32.xlu0 %v63
      %v65 = vpop.xlane.xlu0 %64
      %v66 = vmax.f32 %v65, 1e-24
      %v67 = vrsqrt.pop %v66
      %v68 = vmul.f32 %v67, %v66
      %v69 = vmul.f32 %v68, %v67
      %v70 = vmul.f32 0.5, %v69
      %v71 = vsub.f32 1.5, %v70
      %v72 = vmul.f32 %v67, %v71
      %vm73 = vweird.f32 %v66
      %vm74 = vweird.f32 %v67
      %vm75 = vmor %vm73, %vm74
      %v76 = vsel %vm75, %v67, %v72
      %v77 = vmul.f32 %v76, 2.0
      %v78 = vmul.f32 %v60, %v77
      %v79 = vpack.c.bf16 %v78, %v78
      %vm80 = vcmask 257024
      %81 = vst.msk [vmem:[#allocation2] sm:$0xf] %vm80, %v79
      %vm82 = vcmask 7168
      %83 = vst.msk [vmem:[#allocation4] sm:$0xff] %vm82, 0.0
    $region29: #{tpu_custom_call.1} parent=1 // pred_fallthru
      _
    %v84 = vld [vmem:[#allocation2] sm:$0xf]
    %v85 = vld [vmem:[#allocation7] sm:$0xf]
    %vm86 = vcmask 261120
    %v88 = vsel %vm86, %v84, 0
    %v91 = vsel %vm86, %v85, 0
    %93 = vmatpush.bf16.xpose.msra.mxu0 0
    %94 = vmatpush.bf16.xpose.msra.mxu0 0
    %95 = vmatpush.bf16.xpose.msra.mxu0 0
    %96 = vmatpush.bf16.xpose.msra.mxu0 0
    %97 = vmatpush.bf16.xpose.msra.mxu0 0
    %98 = vmatpush.bf16.xpose.msra.mxu0 0
    %99 = vmatpush.bf16.xpose.msra.mxu0 0
    %100 = vmatpush.bf16.xpose.msra.mxu0 %v91
    %101 = vmatmul.bf16.gmra.mxu0 %v88
    %v102 = vpop.f32.mrf.mxu0
    %v103 = vadd.f32 0.0, %v102
    %v104 = vpop.f32.mrf.mxu0
    %105 = vdwg.mxu0
    %v106 = vld [vmem:[#allocation4] sm:$0xff]
    %v107 = vsub.f32 %v103, 2.0
    %v108 = vmul.f32 %v107, 1.442695
    %v109 = vpow.pop %v108
    %vm110 = vcmask 64512
    %v111 = vsel %vm110, %v109, 0.0
    %112 = vadd.xlane.f32.xlu0 %v111
    %v113 = vpop.xlane.xlu0 %112
    %v114 = vadd.f32 %v106, %v113
    %vm115 = vcmask 7168
    %116 = vst.msk [vmem:[#allocation4] sm:$0xff] %vm115, %v114
    // Predicated region
    $region30: #{tpu_custom_call.1} parent=1 // pred_check
      %p117 = pneg %p56
    $region31: #{tpu_custom_call.1} parent=1 // pred_check_branch
      %119 = sbr.rel (%p117) target = $region33
    $region32: #{tpu_custom_call.1} parent=1 // pred_region
      %v120 = vld [vmem:[#allocation2] sm:$0xf]
      %v121 = vunpack.c.l.bf16 %v120
      %v122 = vld [vmem:[#allocation9] sm:$0xf]
      %v123 = vunpack.c.l.bf16 %v122
      %v124 = vmul.f32 %v121, %v123
      %v125 = vsel %vm86, %v124, 0.0
      %126 = vadd.xlane.f32.xlu0 %v125
      %v127 = vpop.xlane.xlu0 %126
      %v128 = vld [vmem:[#allocation4] sm:$0xff]
      %v129 = vlog2.pop %v128
      %v130 = vmul.f32 %v129, 0.6931472
      %v131 = vadd.f32 %v130, 2.0
      %v132 = vsub.f32 %v131, %v127
      %133 = vst.msk [vmem:[%s3] sm:$0xff] %vm115, %v132
    $region33: #{tpu_custom_call.1} parent=1 // pred_fallthru
      _
    // Predicated region
    $region34: #{tpu_custom_call.1} parent=1 // pred_check
      _
    $region35: #{tpu_custom_call.1} parent=1 // pred_check_branch
      %135 = sbr.rel (0) target = $region37
    $region36: #{tpu_custom_call.1} parent=1 // pred_region
      _
    $region37: #{tpu_custom_call.1} parent=1 // pred_fallthru
      _
    // Predicated region
    $region38: #{tpu_custom_call.1} parent=1 // pred_check
      _
    $region39: #{tpu_custom_call.1} parent=1 // pred_check_branch
      %137 = sbr.rel (0) target = $region41
    $region40: #{tpu_custom_call.1} parent=1 // pred_region
      _
    $region41: #{tpu_custom_call.1} parent=1 // pred_fallthru
      _
    %138 = vsyncpa [#allocation6], 1
    %139 = vsyncpa [#allocation8], 1

</llo_original>
